<compile_context>
chip_gen: v6e
topology: v6e:2x2x1
jax: 0.10.0
libtpu: 0.0.40
codegen_flags: <defaults>
</compile_context>

<pallas_src>
import functools

import jax
import jax.numpy as jnp
from jax.experimental import pallas as pl
from jax.experimental.pallas import tpu as pltpu

PADDING = 1  # the module hard-codes self.padding = 1

# Below this many bytes, kernel launch + per-step overhead dwarfs the ~KBs of
# data movement; XLA's fused pad/concat is strictly faster there.
_MIN_PALLAS_BYTES = 256 * 1024


def _permute_pad_kernel(x_ref, o_ref, *, L, lane_aligned):
    # x_ref: (TR, L) rows of the collapsed (N*C, L) view.
    # o_ref: (TR, L + 2*PADDING)
    if lane_aligned:
        # L % 128 == 0: keep the bulk store lane-dense at offset 0.
        # roll(x, +P)[:, j] == x[:, (j - P) % L], which is exactly
        # out[:, 0:L] (wrap column(s) first, then the body). The rotate runs
        # on the XLU (a free VLIW slot here) and the main slab becomes an
        # unmasked, lane-aligned store. No concatenate -> no extra full-tile
        # copy in vregs.
        r = pltpu.roll(x_ref[...], shift=PADDING, axis=1)
        o_ref[:, :L] = r
        # Trailing wrap columns out[:, L:L+2P] == [x[:, L-P:], x[:, :P]],
        # which is exactly r[:, :2P]: a single masked store into the final
        # partial lane tile (was two 1-lane stores).
        o_ref[:, L:] = r[:, :2 * PADDING]
    else:
        # Ragged L: every store in the row is lane-masked anyway, so use
        # direct sub-slice stores straight off the ref (no concat, no extra
        # full-tile copy, short live ranges).
        # TODO(synk): switch to a roll-based aligned-start store once
        # pltpu.roll wrap semantics for non-128-multiple L are validated on
        # all target generations.
        o_ref[:, :PADDING] = x_ref[:, L - PADDING:L]
        o_ref[:, PADDING:PADDING + L] = x_ref[...]
        o_ref[:, L + PADDING:] = x_ref[:, :PADDING]


def _cdiv(a, b):
    return (a + b - 1) // b


def _round_up(x, m):
    return ((x + m - 1) // m) * m


def _round_down(x, m):
    return (x // m) * m


def _tpu_vmem_capacity_bytes():
    """Per-core VMEM capacity; conservative (v7x) default on failure."""
    try:
        return int(pltpu.get_tpu_info().vmem_capacity_bytes)
    except Exception:
        return 64 * 1024 * 1024


def _tpu_num_tensorcores():
    """TensorCores per device (2 on v7x, 1 on v5e/v6e); 1 on failure."""
    try:
        dev = jax.devices()[0]
        nc = getattr(dev, "num_cores", None)
        if nc:
            return int(nc)
        if "v7" in str(getattr(dev, "device_kind", "")).lower():
            return 2
    except Exception:
        pass
    return 1


def _xla_fallback(x):
    return jnp.concatenate([x[:, :, -PADDING:], x, x[:, :, :PADDING]], axis=2)


def permute_pad(x, *, force_pallas=False):
    """Circular pad of width PADDING along the last axis of (N, C, L)."""
    N, C, L = x.shape
    out_L = L + 2 * PADDING
    rows = N * C
    itemsize = x.dtype.itemsize

    # Tiny tensors: skip the kernel entirely.
    if not force_pallas and x.size * itemsize < _MIN_PALLAS_BYTES:
        return _xla_fallback(x)

    # Pure data-movement op: collapse (N, C) into one row axis (contiguous,
    # free reshape); rows are independent, and large lane-dense row blocks
    # amortize the ~0.35 us/grid-step overhead.
    x2 = x.reshape(rows, L)

    # Sublane tile for the dtype: 8 (f32), 16 (bf16), 32 (int8/fp8).
    sublane = max(8, 32 // max(1, itemsize))

    # ---- Generation-aware VMEM sizing --------------------------------------
    # v5e/v6e: 128 MiB physical -> 64 MiB scoped limit, 32 MiB block budget.
    # v7x:      64 MiB physical -> 32 MiB scoped limit, 16 MiB block budget.
    vmem_cap = _tpu_vmem_capacity_bytes()
    num_cores = _tpu_num_tensorcores()
    vmem_limit = int(min(64 * 1024 * 1024, max(32 * 1024 * 1024, vmem_cap // 2)))
    block_budget = vmem_limit // 2

    bytes_per_row = 2 * (L + out_L) * itemsize  # double-buffered in + out
    if sublane * bytes_per_row > block_budget:
        # L too long to row-tile within VMEM; degrade gracefully to XLA.
        return _xla_fallback(x)

    rows_by_vmem = max(sublane, block_budget // max(1, bytes_per_row))
    # Cap raised from 2048 -> 8192: this kernel is pure HBM bandwidth, so the
    # only in-core cost is per-step overhead; the cap just bounds unrolled
    # per-tile code size.
    max_rows = max(sublane, min(8192, _round_down(rows_by_vmem, sublane)))

    if rows <= sublane:
        # Full-dim row block: always layout-legal, single step.
        row_block, num_blocks = rows, 1
    else:
        row_block = min(max_rows, _round_down(rows, sublane))
        num_blocks = _cdiv(rows, row_block)
        # Only on 2-TensorCore chips (v7x): prefer an even number of grid
        # steps so the "parallel" row axis splits evenly across both cores.
        # On single-TC v5e/v6e, fewer/bigger steps is strictly better.
        if num_cores >= 2 and num_blocks % 2 == 1:
            row_block = max(sublane,
                            _round_up(_cdiv(rows, num_blocks + 1), sublane))
            row_block = min(row_block, _round_down(rows, sublane))
            num_blocks = _cdiv(rows, row_block)

    kernel = functools.partial(
        _permute_pad_kernel, L=L, lane_aligned=(L % 128 == 0))

    out2 = pl.pallas_call(
        kernel,
        out_shape=jax.ShapeDtypeStruct((rows, out_L), x.dtype),
        grid=(num_blocks,),
        # Partial last block (rows % row_block != 0) is fine: out row i only
        # depends on in row i, and OOB writes of the last block are masked.
        in_specs=[pl.BlockSpec((row_block, L), lambda i: (i, 0))],
        out_specs=pl.BlockSpec((row_block, out_L), lambda i: (i, 0)),
        compiler_params=pltpu.CompilerParams(
            dimension_semantics=("parallel",),
            vmem_limit_bytes=vmem_limit),
    )(x2)
    return out2.reshape(N, C, out_L)


if __name__ == "__main__":
    key = jax.random.PRNGKey(0)
    k_small, k_ragged, k_big = jax.random.split(key, 3)

    def reference(x):
        return jnp.concatenate(
            [x[:, :, -PADDING:], x, x[:, :, :PADDING]], axis=2)

    # Small shape implied by the module (batch=2, channels=4, seq_len=16):
    # ragged-L path, rows == sublane.
    x_small = jax.random.normal(k_small, (2, 4, 16), dtype=jnp.float32)
    out_small = jax.block_until_ready(permute_pad(x_small, force_pallas=True))
    assert out_small.shape == (2, 4, 16 + 2 * PADDING), out_small.shape
    assert out_small.dtype == x_small.dtype
    assert jnp.array_equal(out_small, reference(x_small)), "small-case mismatch"

    # rows (= 9) not a multiple of the sublane tile: exercises the cdiv grid
    # with a masked partial last block, plus the lane-aligned roll path.
    x_rag = jax.random.normal(k_ragged, (3, 3, 128), dtype=jnp.float32)
    out_rag = jax.block_until_ready(permute_pad(x_rag, force_pallas=True))
    assert out_rag.shape == (3, 3, 128 + 2 * PADDING), out_rag.shape
    assert jnp.array_equal(out_rag, reference(x_rag)), "partial-block mismatch"

    # Larger case: lane-aligned roll path, multi-step parallel grid on 2-TC
    # chips / single big block on 1-TC chips.
    x_big = jax.random.normal(k_big, (4, 64, 256), dtype=jnp.float32)
    out_big = jax.block_until_ready(permute_pad(x_big))
    assert out_big.shape == (4, 64, 256 + 2 * PADDING), out_big.shape
    assert out_big.dtype == x_big.dtype
    assert jnp.array_equal(out_big, reference(x_big)), "large-case mismatch"

    print("KERNEL_OK")
</pallas_src>

<mosaic_0001>
module attributes {stable_mosaic.version = 11 : i64} {
  func.func @_permute_pad_kernel(%arg0: i32, %arg1: memref<8x16xf32, #tpu.memory_space<vmem>>, %arg2: memref<8x18xf32, #tpu.memory_space<vmem>>) attributes {dimension_semantics = [#tpu.dimension_semantics<parallel>], iteration_bounds = array<i64: 1>, scalar_prefetch = 0 : i64, scratch_operands = 0 : i64, tpu.core_type = #tpu.core_type<tc>, window_params = [{transform_indices = @transform_0, window_bounds = array<i64: 8, 16>}, {transform_indices = @transform_1, window_bounds = array<i64: 8, 18>}]} {
    %c0 = arith.constant 0 : index
    %c15 = arith.constant 15 : index
    %0 = vector.load %arg1[%c0, %c15] : memref<8x16xf32, #tpu.memory_space<vmem>>, vector<8x1xf32>
    %c0_0 = arith.constant 0 : index
    %c0_1 = arith.constant 0 : index
    %1 = vector.load %arg2[%c0_0, %c0_1] : memref<8x18xf32, #tpu.memory_space<vmem>>, vector<8x1xf32>
    tpu.vector_store %arg2[%c0_0, %c0_1], %0 {strides = array<i32>} : memref<8x18xf32, #tpu.memory_space<vmem>>, vector<8x1xf32>,
    %c0_2 = arith.constant 0 : index
    %c0_3 = arith.constant 0 : index
    %2 = vector.load %arg1[%c0_2, %c0_3] : memref<8x16xf32, #tpu.memory_space<vmem>>, vector<8x16xf32>
    %c0_4 = arith.constant 0 : index
    %c1 = arith.constant 1 : index
    %3 = vector.load %arg2[%c0_4, %c1] : memref<8x18xf32, #tpu.memory_space<vmem>>, vector<8x16xf32>
    tpu.vector_store %arg2[%c0_4, %c1], %2 {strides = array<i32>} : memref<8x18xf32, #tpu.memory_space<vmem>>, vector<8x16xf32>,
    %c0_5 = arith.constant 0 : index
    %c0_6 = arith.constant 0 : index
    %4 = vector.load %arg1[%c0_5, %c0_6] : memref<8x16xf32, #tpu.memory_space<vmem>>, vector<8x1xf32>
    %c0_7 = arith.constant 0 : index
    %c17 = arith.constant 17 : index
    %5 = vector.load %arg2[%c0_7, %c17] : memref<8x18xf32, #tpu.memory_space<vmem>>, vector<8x1xf32>
    tpu.vector_store %arg2[%c0_7, %c17], %4 {strides = array<i32>} : memref<8x18xf32, #tpu.memory_space<vmem>>, vector<8x1xf32>,
    return
  }
  func.func @transform_0(%arg0: i32) -> (i32, i32) {
    %c0_i32 = arith.constant 0 : i32
    %c0_i32_0 = arith.constant 0 : i32
    return %arg0, %c0_i32 : i32, i32
  }
  func.func @transform_1(%arg0: i32) -> (i32, i32) {
    %c0_i32 = arith.constant 0 : i32
    %c0_i32_0 = arith.constant 0 : i32
    return %arg0, %c0_i32 : i32, i32
  }
}

</mosaic_0001>

<llo_original>
// kernel: tpu_custom_call.1
$region0: #{tpu_custom_call.1}
  #allocation0 [shape = 'u32[]', space=smem, size = 0x4, offset = 0x4, fixed_abs, tag = 'smem constant byte address 0x4 - core index']
  #allocation1 [shape = 'u32[144,128]{1,0:T(1,128)}', space=vmem, size = 0x12000, scoped, tag = 'internal scratch']
  %s0 = inlined_call_operand.hbm [shape: f32[8,16], index: 0, kind: input, shape index: {}]
  %s1 = inlined_call_operand.hbm [shape: f32[8,18], index: 1, kind: output, shape index: {}]
  %s2 = sld [smem:[#allocation0]]
  $region18: #{tpu_custom_call.1} parent=0
    _
  %s4 = ssub.s32 1, %s2
  %s5 = scalar_select 0, %s4, %s2
  $region1: #{tpu_custom_call.1} parent=0
    #allocation2 [shape = 'u8[4096]{0}', space=vmem, size = 0x1000, scoped, tag = 'input window, operand 0, single buffered']
    #allocation3 [shape = 's32[1]{0}', space=sflag, size = 0x4, scoped, tag = 'scoped memory for tpu_custom_call.1']
    #allocation4 [shape = 's32[1]{0}', space=sflag, size = 0x4, scoped, tag = 'scoped memory for tpu_custom_call.1']
    #allocation5 [shape = 'u8[4096]{0}', space=vmem, size = 0x1000, scoped, tag = 'output window, operand 0, single buffered']
    %6 = vsyncpa [#allocation3], 0
    %7 = vsyncpa [#allocation4], 0
    // Predicated region
    $region2: #{tpu_custom_call.1} parent=1 // pred_check
      _
    $region3: #{tpu_custom_call.1} parent=1 // pred_check_branch
      %9 = sbr.rel (0) target = $region5
    $region4: #{tpu_custom_call.1} parent=1 // pred_region
      %s11 = ssub.s32 128, 128
      %12 = vsyncadd [#allocation3], %s11
      %s14 = sshll.u32 [#allocation2], 4
      %s15 = int_to_ptr.vmem [resolvable:$true] %s14
      %17 = dma.hbm_to_vmem [thread:$0]  %s0, 128, %s15, [#allocation3]
    $region5: #{tpu_custom_call.1} parent=1 // pred_fallthru
      _
    // Predicated region
    $region6: #{tpu_custom_call.1} parent=1 // pred_check
      _
    $region7: #{tpu_custom_call.1} parent=1 // pred_check_branch
      %19 = sbr.rel (0) target = $region9
    $region8: #{tpu_custom_call.1} parent=1 // pred_region
      %20 = dma.done [#allocation3], 128
    $region9: #{tpu_custom_call.1} parent=1 // pred_fallthru
      _
    %v21 = vld [vmem:[#allocation2] sm:$0xff]
    %23 = vrot.lane.b32.xlu0 %v21, 113
    %v24 = vpop.permute.xlu0 %23
    %vm26 = vcmask 7168
    %27 = vst.msk [vmem:[#allocation5] sm:$0xff] %vm26, %v24
    %v28 = vld [vmem:[#allocation2] sm:$0xff]
    %30 = vrot.lane.b32.xlu0 %v28, 1
    %v31 = vpop.permute.xlu0 %30
    %vm33 = vcmask 138248
    %34 = vst.msk [vmem:[#allocation5] sm:$0xff] %vm33, %v31
    %v35 = vld [vmem:[#allocation2] sm:$0xff]
    %37 = vrot.lane.b32.xlu0 %v35, 17
    %v38 = vpop.permute.xlu0 %37
    %vm40 = vcmask 146568
    %41 = vst.msk [vmem:[#allocation5] sm:$0xff] %vm40, %v38
    // Predicated region
    $region10: #{tpu_custom_call.1} parent=1 // pred_check
      _
    $region11: #{tpu_custom_call.1} parent=1 // pred_check_branch
      %43 = sbr.rel (0) target = $region13
    $region12: #{tpu_custom_call.1} parent=1 // pred_region
      %s45 = ssub.s32 128, 128
      %46 = vsyncadd [#allocation4], %s45
      %s48 = sshll.u32 [#allocation5], 4
      %s49 = int_to_ptr.vmem [resolvable:$true] %s48
      %51 = dma.vmem_to_hbm [thread:$0]  %s49, 128, %s1, [#allocation4]
    $region13: #{tpu_custom_call.1} parent=1 // pred_fallthru
      _
    // Predicated region
    $region14: #{tpu_custom_call.1} parent=1 // pred_check
      _
    $region15: #{tpu_custom_call.1} parent=1 // pred_check_branch
      %53 = sbr.rel (0) target = $region17
    $region16: #{tpu_custom_call.1} parent=1 // pred_region
      %54 = dma.done [#allocation4], 128
    $region17: #{tpu_custom_call.1} parent=1 // pred_fallthru
      _
    %55 = vsyncpa [#allocation3], 1
    %56 = vsyncpa [#allocation4], 1

</llo_original>
